<compile_context>
chip_gen: v6e
topology: v6e:2x2x1
jax: 0.10.0
libtpu: 0.0.40
codegen_flags: <defaults>
</compile_context>

<pallas_src>
import jax
import jax.numpy as jnp
from jax.experimental import pallas as pl
from jax.experimental.pallas import tpu as pltpu


def _identity_kernel(x_ref, o_ref):
    # Pass-through: this is where a concrete PGGNet subclass would put its
    # conv / matmul / activation hot path.
    o_ref[...] = x_ref[...]


def _sublane_multiple(dtype) -> int:
    """Minimum partial-block sublane multiple for the dtype's packing."""
    itemsize = jnp.dtype(dtype).itemsize
    if itemsize >= 4:
        return 8
    if itemsize == 2:
        return 16
    return 32


def _pick_lane_width(total: int, last_dim: int) -> int:
    """Largest multiple-of-128 divisor of `total` (capped at 32768)."""
    cap = min(32768, total)
    start = (cap // 128) * 128
    for cand in range(start, 127, -128):
        if total % cand == 0:
            return cand
    # TODO(synk): total has no multiple-of-128 divisor; a 128-aligned main
    # slab + tiny remainder kernel would restore unmasked stores.  Fall back
    # to the original (possibly narrow, masked-store) last dim.
    return last_dim


def _generation_params():
    """(target_tile_bytes, vmem_limit_bytes) tuned per TPU generation."""
    # Conservative defaults (safe on v7x: 64 MiB VMEM per TensorCore).
    target_tile_bytes = 3 * 1024 * 1024
    vmem_limit = 32 * 1024 * 1024
    try:
        info = pltpu.get_tpu_info()
        vmem_cap = getattr(info, "vmem_capacity_bytes", None)
        if vmem_cap is not None and vmem_cap >= 100 * 1024 * 1024:
            # v5e / v6e: 128 MiB VMEM -> bigger tiles, fewer grid steps.
            target_tile_bytes = 6 * 1024 * 1024
            vmem_limit = 64 * 1024 * 1024
    except Exception:
        pass  # unknown generation -> keep conservative defaults
    return target_tile_bytes, vmem_limit


def base_model_forward(x: jax.Array, *, force_kernel: bool = False,
                       donate: bool = False) -> jax.Array:
    """Identity forward of the (parameter-less) BaseModel.

    For the pure identity path the tensor is returned as-is (zero HBM
    traffic).  `force_kernel=True` routes through the lane-dense Pallas copy
    kernel — the template a concrete subclass replaces with real compute.
    Set `donate=True` only if the caller donates x's buffer.
    """
    if not force_kernel:
        # Review item #1: skip the kernel entirely for the true identity.
        return x

    orig_shape = x.shape
    total = int(x.size)
    itemsize = jnp.dtype(x.dtype).itemsize

    # Lane-dense slab: flatten so the last dim is a big multiple of 128
    # (contiguous reshape == bitcast, no data movement).
    L = _pick_lane_width(total, orig_shape[-1] if orig_shape else 1)
    R = total // L
    x2d = x.reshape(R, L)

    target_tile_bytes, vmem_limit = _generation_params()
    sub = _sublane_multiple(x.dtype)
    row_bytes = L * itemsize

    tile_r = max(1, target_tile_bytes // row_bytes)
    tile_r = min(tile_r, R)
    if tile_r < R:
        # Partial blocks must obey the packed (sublane, 128) tiling.
        tile_r = max(sub, (tile_r // sub) * sub)
        tile_r = min(tile_r, R)
    grid_r = pl.cdiv(R, tile_r)

    # v7x megacore: make sure the parallel row axis has >= 2 steps so both
    # TensorCores get work (near-free extra step on single-TC chips).
    if grid_r == 1 and R >= 2 * sub:
        tile_r = max(sub, (((R + 1) // 2) // sub) * sub)
        grid_r = pl.cdiv(R, tile_r)

    aliases = {0: 0} if donate else {}

    out2d = pl.pallas_call(
        _identity_kernel,
        out_shape=jax.ShapeDtypeStruct((R, L), x.dtype),
        grid=(grid_r,),
        in_specs=[pl.BlockSpec((tile_r, L), lambda i: (i, 0))],
        out_specs=pl.BlockSpec((tile_r, L), lambda i: (i, 0)),
        input_output_aliases=aliases,
        cost_estimate=pl.CostEstimate(
            flops=0, transcendentals=0,
            bytes_accessed=2 * total * itemsize),
        compiler_params=pltpu.CompilerParams(
            dimension_semantics=("parallel",),  # lets v7x split rows over 2 TCs
            vmem_limit_bytes=vmem_limit,
        ),
    )(x2d)

    return out2d.reshape(orig_shape)


def num_trainable_parameters() -> int:
    """Mirror of BaseModel.summary()/__str__(): BaseModel owns no parameters."""
    params = {}  # the base class registers no nn.Parameters
    return sum(int(jnp.prod(jnp.array(p.shape))) for p in params.values())


if __name__ == "__main__":
    key = jax.random.PRNGKey(0)
    # Small NCHW input consistent with an image-model base class.
    x = jax.random.normal(key, (2, 4, 16, 16), dtype=jnp.float32)

    # Fast path: identity without touching HBM.
    y_fast = base_model_forward(x)
    assert y_fast is x or bool(jnp.allclose(y_fast, x))

    # Kernel path: exercise the Pallas copy kernel once and validate.
    y = base_model_forward(x, force_kernel=True)
    y = jax.block_until_ready(y)

    assert y.shape == x.shape and y.dtype == x.dtype
    assert bool(jnp.allclose(y, x))
    assert num_trainable_parameters() == 0

    print("KERNEL_OK")
</pallas_src>

<mosaic_0001>
module attributes {stable_mosaic.version = 11 : i64} {
  func.func @_identity_kernel(%arg0: i32, %arg1: memref<1x2048xf32, #tpu.memory_space<vmem>>, %arg2: memref<1x2048xf32, #tpu.memory_space<vmem>>) attributes {dimension_semantics = [#tpu.dimension_semantics<parallel>], iteration_bounds = array<i64: 1>, scalar_prefetch = 0 : i64, scratch_operands = 0 : i64, tpu.core_type = #tpu.core_type<tc>, window_params = [{transform_indices = @transform_0, window_bounds = array<i64: 1, 2048>}, {transform_indices = @transform_1, window_bounds = array<i64: 1, 2048>}]} {
    %c0 = arith.constant 0 : index
    %c0_0 = arith.constant 0 : index
    %0 = vector.load %arg1[%c0, %c0_0] : memref<1x2048xf32, #tpu.memory_space<vmem>>, vector<1x2048xf32>
    %c0_1 = arith.constant 0 : index
    %c0_2 = arith.constant 0 : index
    %1 = vector.load %arg2[%c0_1, %c0_2] : memref<1x2048xf32, #tpu.memory_space<vmem>>, vector<1x2048xf32>
    tpu.vector_store %arg2[%c0_1, %c0_2], %0 {strides = array<i32>} : memref<1x2048xf32, #tpu.memory_space<vmem>>, vector<1x2048xf32>,
    return
  }
  func.func @transform_0(%arg0: i32) -> (i32, i32) {
    %c0_i32 = arith.constant 0 : i32
    %c0_i32_0 = arith.constant 0 : i32
    return %arg0, %c0_i32 : i32, i32
  }
  func.func @transform_1(%arg0: i32) -> (i32, i32) {
    %c0_i32 = arith.constant 0 : i32
    %c0_i32_0 = arith.constant 0 : i32
    return %arg0, %c0_i32 : i32, i32
  }
}

</mosaic_0001>

<llo_original>
// kernel: tpu_custom_call.1
$region0: #{tpu_custom_call.1}
  #allocation0 [shape = 'u32[]', space=smem, size = 0x4, offset = 0x4, fixed_abs, tag = 'smem constant byte address 0x4 - core index']
  #allocation1 [shape = 'u32[144,128]{1,0:T(1,128)}', space=vmem, size = 0x12000, scoped, tag = 'internal scratch']
  %s0 = inlined_call_operand.hbm [shape: f32[1,2048], index: 0, kind: input, shape index: {}]
  %s1 = inlined_call_operand.hbm [shape: f32[1,2048], index: 1, kind: output, shape index: {}]
  %s2 = sld [smem:[#allocation0]]
  $region18: #{tpu_custom_call.1} parent=0
    _
  %s4 = ssub.s32 1, %s2
  %s5 = scalar_select 0, %s4, %s2
  $region1: #{tpu_custom_call.1} parent=0
    #allocation2 [shape = 'u8[8192]{0}', space=vmem, size = 0x2000, scoped, tag = 'input window, operand 0, single buffered']
    #allocation3 [shape = 's32[1]{0}', space=sflag, size = 0x4, scoped, tag = 'scoped memory for tpu_custom_call.1']
    #allocation4 [shape = 's32[1]{0}', space=sflag, size = 0x4, scoped, tag = 'scoped memory for tpu_custom_call.1']
    #allocation5 [shape = 'u8[8192]{0}', space=vmem, size = 0x2000, scoped, tag = 'output window, operand 0, single buffered']
    %6 = vsyncpa [#allocation3], 0
    %7 = vsyncpa [#allocation4], 0
    // Predicated region
    $region2: #{tpu_custom_call.1} parent=1 // pred_check
      _
    $region3: #{tpu_custom_call.1} parent=1 // pred_check_branch
      %9 = sbr.rel (0) target = $region5
    $region4: #{tpu_custom_call.1} parent=1 // pred_region
      %s11 = ssub.s32 256, 256
      %12 = vsyncadd [#allocation3], %s11
      %s14 = sshll.u32 [#allocation2], 4
      %s15 = int_to_ptr.vmem [resolvable:$true] %s14
      %17 = dma.hbm_to_vmem [thread:$0]  %s0, 256, %s15, [#allocation3]
    $region5: #{tpu_custom_call.1} parent=1 // pred_fallthru
      _
    // Predicated region
    $region6: #{tpu_custom_call.1} parent=1 // pred_check
      _
    $region7: #{tpu_custom_call.1} parent=1 // pred_check_branch
      %19 = sbr.rel (0) target = $region9
    $region8: #{tpu_custom_call.1} parent=1 // pred_region
      %20 = dma.done [#allocation3], 256
    $region9: #{tpu_custom_call.1} parent=1 // pred_fallthru
      _
    %v21 = vld [vmem:[#allocation2] sm:$0xff]
    %v22 = vld [vmem:[#allocation2 + $0x8] sm:$0xff]
    %23 = vst [vmem:[#allocation5] sm:$0xff] %v21
    %24 = vst [vmem:[#allocation5 + $0x8] sm:$0xff] %v22
    // Predicated region
    $region10: #{tpu_custom_call.1} parent=1 // pred_check
      _
    $region11: #{tpu_custom_call.1} parent=1 // pred_check_branch
      %26 = sbr.rel (0) target = $region13
    $region12: #{tpu_custom_call.1} parent=1 // pred_region
      %s28 = ssub.s32 256, 256
      %29 = vsyncadd [#allocation4], %s28
      %s31 = sshll.u32 [#allocation5], 4
      %s32 = int_to_ptr.vmem [resolvable:$true] %s31
      %34 = dma.vmem_to_hbm [thread:$0]  %s32, 256, %s1, [#allocation4]
    $region13: #{tpu_custom_call.1} parent=1 // pred_fallthru
      _
    // Predicated region
    $region14: #{tpu_custom_call.1} parent=1 // pred_check
      _
    $region15: #{tpu_custom_call.1} parent=1 // pred_check_branch
      %36 = sbr.rel (0) target = $region17
    $region16: #{tpu_custom_call.1} parent=1 // pred_region
      %37 = dma.done [#allocation4], 256
    $region17: #{tpu_custom_call.1} parent=1 // pred_fallthru
      _
    %38 = vsyncpa [#allocation3], 1
    %39 = vsyncpa [#allocation4], 1

</llo_original>
